<compile_context>
chip_gen: v7x
topology: tpu7x:2x2x1
jax: 0.10.0
libtpu: 0.0.40
codegen_flags: <defaults>
</compile_context>

<pallas_src>
import functools

import jax
import jax.numpy as jnp
from jax import lax
from jax.experimental import pallas as pl
from jax.experimental.pallas import tpu as pltpu


def _round_up(x, m):
    return ((x + m - 1) // m) * m


def _cdiv(a, b):
    return (a + b - 1) // b


def _padded_bytes(rows, cols, itemsize):
    # VMEM buffers are laid out in (8, 128) tiles.
    return _round_up(rows, 8) * _round_up(cols, 128) * itemsize


def _vmem_limit(resident_bytes):
    # 2x headroom + 4 MiB, floored at 32 MiB so we never under-provision the
    # compiler's own scratch, capped below physical VMEM on all generations.
    return int(min(max(2 * resident_bytes + (4 << 20), 32 << 20), 100 << 20))


# ---------------------------------------------------------------------------
# Kernel 1: fused QKV projection  x @ [Wq*scale | Wk | Wv]   (run once)
# ---------------------------------------------------------------------------
def _qkv_proj_kernel(x_ref, w_ref, q_ref, kv_ref, *, d_out_p):
    acc = jnp.dot(x_ref[...], w_ref[...], preferred_element_type=jnp.float32)
    # Static, 128-lane-aligned slices of the f32 accumulator; stored once in the
    # matmul dtype so the attention kernel never re-casts K/V per grid step.
    q_ref[...] = acc[:, :d_out_p].astype(q_ref.dtype)
    kv_ref[...] = acc[:, d_out_p:].astype(kv_ref.dtype)


# ---------------------------------------------------------------------------
# Kernel 2: attention for one query tile (scores -> softmax -> context)
# ---------------------------------------------------------------------------
def _attn_kernel(q_ref, kv_ref, o_ref, *, d_out_p, n_valid_keys, mask_keys):
    q = q_ref[...]            # (tq,    d_out_p)  mm_dtype
    k = kv_ref[:, :d_out_p]   # (S_pad, d_out_p)  static lane-aligned slice
    v = kv_ref[:, d_out_p:]   # (S_pad, d_out_p)

    # scores = q @ k.T without materializing k.T: contract last axis of both.
    scores = lax.dot_general(
        q, k,
        dimension_numbers=(((1,), (1,)), ((), ())),
        preferred_element_type=jnp.float32,
    )  # (tq, S_pad) f32

    if mask_keys:
        # Padded key rows (zero x rows) would otherwise contribute exp(0) to the
        # softmax denominator; mask them to -inf.
        col = lax.broadcasted_iota(jnp.int32, scores.shape, 1)
        scores = jnp.where(col < n_valid_keys, scores, -jnp.inf)

    # Numerically stable softmax; elementwise math stays f32 (v5e: no bf16 EUP).
    m = jnp.max(scores, axis=-1, keepdims=True)
    e = jnp.exp(scores - m)
    denom = jnp.sum(e, axis=-1, keepdims=True)

    # Deferred normalization: normalize the (tq, d_out_p) context, not (tq, S).
    ctx = jnp.dot(e.astype(v.dtype), v, preferred_element_type=jnp.float32)
    # Exact divide: denom is only (tq, 1), so approx reciprocal saves nothing.
    o_ref[...] = (ctx / denom).astype(o_ref.dtype)


# ---------------------------------------------------------------------------
# Wrapper
# ---------------------------------------------------------------------------
def self_attention(x, w_q, w_k, w_v, *, q_tile=256, use_bf16_matmuls=True):
    """Pallas TPU forward matching the PyTorch SelfAttention module.

    q_tile: 256 suits v6e/v7x (2x256x256 MXU); sweep 128 on v5e.
    use_bf16_matmuls: bf16 MXU operands with f32 accumulation (default).  Pass
    False for full-f32 matmuls.
    """
    S, d_in = x.shape
    d_out = w_q.shape[1]
    out_dtype = x.dtype
    mm_dtype = jnp.bfloat16 if use_bf16_matmuls else jnp.float32
    msz = jnp.dtype(mm_dtype).itemsize
    osz = jnp.dtype(out_dtype).itemsize

    # --- lane-dense head dim: pad d_out up to a multiple of 128 lanes --------
    d_out_p = _round_up(d_out, 128)
    pad_cols = lambda w: jnp.pad(w, ((0, 0), (0, d_out_p - d_out)))
    scale = 1.0 / (float(d_out) ** 0.5)   # ORIGINAL d_out, matches torch
    w_qkv = jnp.concatenate(
        [pad_cols(w_q) * scale, pad_cols(w_k), pad_cols(w_v)], axis=1
    ).astype(mm_dtype)                    # (d_in, 3*d_out_p)

    # --- query-tile grid ------------------------------------------------------
    q_tile = _round_up(int(q_tile), 8)
    tq = min(q_tile, _round_up(S, 8))
    if _cdiv(S, tq) < 2 and S >= 256:
        # v7x has 2 TensorCores: give a "parallel" grid >= 2 steps when the
        # sequence is long enough that splitting keeps the MXU rows full.
        tq = _round_up(_cdiv(S, 2), 8)
    S_pad = _round_up(S, tq)
    n_q = S_pad // tq
    x_p = x if S_pad == S else jnp.pad(x, ((0, S_pad - S), (0, 0)))
    x_p = x_p.astype(mm_dtype)

    # ---------------- pass 1: one-shot fused QKV projection ------------------
    proj_resident = (
        2 * (_padded_bytes(tq, d_in, msz)
             + _padded_bytes(d_in, 3 * d_out_p, msz)
             + _padded_bytes(tq, d_out_p, msz)
             + _padded_bytes(tq, 2 * d_out_p, msz))
        + _padded_bytes(tq, 3 * d_out_p, 4)          # f32 accumulator temp
    )
    proj_cost = pl.CostEstimate(
        flops=2 * S_pad * d_in * 3 * d_out_p,
        transcendentals=0,
        bytes_accessed=(S_pad * d_in * msz
                        + d_in * 3 * d_out_p * msz
                        + S_pad * 3 * d_out_p * msz),
    )
    q_all, kv_all = pl.pallas_call(
        functools.partial(_qkv_proj_kernel, d_out_p=d_out_p),
        out_shape=(jax.ShapeDtypeStruct((S_pad, d_out_p), mm_dtype),
                   jax.ShapeDtypeStruct((S_pad, 2 * d_out_p), mm_dtype)),
        grid_spec=pltpu.PrefetchScalarGridSpec(
            num_scalar_prefetch=0,
            grid=(n_q,),
            in_specs=[
                pl.BlockSpec((tq, d_in), lambda i: (i, 0)),            # x rows
                pl.BlockSpec((d_in, 3 * d_out_p), lambda i: (0, 0)),   # weights (fetched once)
            ],
            out_specs=[
                pl.BlockSpec((tq, d_out_p), lambda i: (i, 0)),
                pl.BlockSpec((tq, 2 * d_out_p), lambda i: (i, 0)),
            ],
        ),
        compiler_params=pltpu.CompilerParams(
            dimension_semantics=("parallel",),
            vmem_limit_bytes=_vmem_limit(proj_resident),
        ),
        cost_estimate=proj_cost,
    )(x_p, w_qkv)

    # ---------------- pass 2: attention over query tiles ---------------------
    attn_resident = (
        2 * (_padded_bytes(tq, d_out_p, msz)               # q tile (double-buffered)
             + _padded_bytes(S_pad, 2 * d_out_p, msz)      # fused K|V block
             + _padded_bytes(tq, d_out_p, osz))            # output tile
        + 2 * _padded_bytes(tq, S_pad, 4)                  # scores + exp temps
        + _padded_bytes(tq, d_out_p, 4)                    # f32 context temp
    )
    attn_cost = pl.CostEstimate(
        flops=4 * S_pad * S_pad * d_out_p,
        transcendentals=S_pad * S_pad,
        bytes_accessed=(S_pad * d_out_p * msz              # q (read once, tiled)
                        + S_pad * 2 * d_out_p * msz        # K|V (fetched once)
                        + S_pad * d_out_p * osz),          # output
    )
    out_padded = pl.pallas_call(
        functools.partial(_attn_kernel, d_out_p=d_out_p,
                          n_valid_keys=S, mask_keys=(S_pad != S)),
        out_shape=jax.ShapeDtypeStruct((S_pad, d_out_p), out_dtype),
        grid_spec=pltpu.PrefetchScalarGridSpec(
            num_scalar_prefetch=0,
            grid=(n_q,),
            in_specs=[
                pl.BlockSpec((tq, d_out_p), lambda i: (i, 0)),          # q tile
                # grid-invariant fused K|V: constant index_map -> fetched once
                pl.BlockSpec((S_pad, 2 * d_out_p), lambda i: (0, 0)),
            ],
            out_specs=pl.BlockSpec((tq, d_out_p), lambda i: (i, 0)),    # lane-dense store
        ),
        compiler_params=pltpu.CompilerParams(
            dimension_semantics=("parallel",),        # shards q tiles over 2 TCs on v7x
            vmem_limit_bytes=_vmem_limit(attn_resident),
        ),
        cost_estimate=attn_cost,
    )(q_all, kv_all)

    return out_padded[:S, :d_out]


def self_attention_ref(x, w_q, w_k, w_v):
    hp = lax.Precision.HIGHEST
    q = jnp.dot(x, w_q, precision=hp)
    k = jnp.dot(x, w_k, precision=hp)
    v = jnp.dot(x, w_v, precision=hp)
    s = jnp.dot(q, k.T, precision=hp) / jnp.sqrt(jnp.float32(k.shape[-1]))
    return jnp.dot(jax.nn.softmax(s, axis=-1), v, precision=hp)


if __name__ == "__main__":
    root = jax.random.PRNGKey(0)
    key_small, key_big = jax.random.split(root, 2)

    def make_inputs(key, seq_len, d_in, d_out):
        kx, kq, kk, kv = jax.random.split(key, 4)
        x = jax.random.normal(kx, (seq_len, d_in), dtype=jnp.float32)
        # torch.rand -> uniform [0, 1)
        w_q = jax.random.uniform(kq, (d_in, d_out), dtype=jnp.float32)
        w_k = jax.random.uniform(kk, (d_in, d_out), dtype=jnp.float32)
        w_v = jax.random.uniform(kv, (d_in, d_out), dtype=jnp.float32)
        return x, w_q, w_k, w_v

    # --- small shapes implied by the module: x (seq, d_in), weights (d_in, d_out)
    seq_len, d_in, d_out = 8, 32, 32
    x, w_q, w_k, w_v = make_inputs(key_small, seq_len, d_in, d_out)
    ref = self_attention_ref(x, w_q, w_k, w_v)

    # f32-matmul path: tight-ish check (exact divide; no approx reciprocal).
    out_f32 = self_attention(x, w_q, w_k, w_v, use_bf16_matmuls=False)
    jax.block_until_ready(out_f32)
    assert out_f32.shape == (seq_len, d_out)
    assert jnp.allclose(out_f32, ref, atol=1e-2, rtol=1e-2), "f32 mismatch vs reference"

    # Default path (bf16 MXU operands, f32 accumulation / softmax): looser check
    # since the operands themselves round to bf16.
    out_bf16 = self_attention(x, w_q, w_k, w_v)
    jax.block_until_ready(out_bf16)
    assert out_bf16.shape == (seq_len, d_out)
    assert bool(jnp.all(jnp.isfinite(out_bf16)))
    assert jnp.allclose(out_bf16, ref, atol=0.25, rtol=0.25), "bf16 mismatch vs reference"

    # --- multi-tile grid + padded (masked) keys + padded d_out path ----------
    x2, w_q2, w_k2, w_v2 = make_inputs(key_big, 200, 64, 48)
    ref2 = self_attention_ref(x2, w_q2, w_k2, w_v2)
    out2 = self_attention(x2, w_q2, w_k2, w_v2, q_tile=128, use_bf16_matmuls=False)
    jax.block_until_ready(out2)
    assert out2.shape == (200, 48)
    assert jnp.allclose(out2, ref2, atol=2e-2, rtol=2e-2), "tiled/masked mismatch vs reference"

    print("KERNEL_OK")
</pallas_src>

<mosaic_0001>
module attributes {stable_mosaic.version = 11 : i64} {
  func.func @_qkv_proj_kernel(%arg0: i32, %arg1: memref<8x32xf32, #tpu.memory_space<vmem>>, %arg2: memref<32x384xf32, #tpu.memory_space<vmem>>, %arg3: memref<8x128xf32, #tpu.memory_space<vmem>>, %arg4: memref<8x256xf32, #tpu.memory_space<vmem>>) attributes {dimension_semantics = [#tpu.dimension_semantics<parallel>], iteration_bounds = array<i64: 1>, scalar_prefetch = 0 : i64, scratch_operands = 0 : i64, tpu.core_type = #tpu.core_type<tc>, window_params = [{transform_indices = @transform_0, window_bounds = array<i64: 8, 32>}, {pipeline_mode = #tpu.pipeline_mode<synchronous>, transform_indices = @transform_1, window_bounds = array<i64: 32, 384>}, {transform_indices = @transform_2, window_bounds = array<i64: 8, 128>}, {transform_indices = @transform_3, window_bounds = array<i64: 8, 256>}]} {
    %c0 = arith.constant 0 : index
    %c0_0 = arith.constant 0 : index
    %0 = vector.load %arg1[%c0, %c0_0] : memref<8x32xf32, #tpu.memory_space<vmem>>, vector<8x32xf32>
    %c0_1 = arith.constant 0 : index
    %c0_2 = arith.constant 0 : index
    %1 = vector.load %arg2[%c0_1, %c0_2] : memref<32x384xf32, #tpu.memory_space<vmem>>, vector<32x384xf32>
    %cst = arith.constant dense<0.000000e+00> : vector<8x384xf32>
    %2 = tpu.matmul %0, %1, %cst {dimension_numbers = #tpu.dot_dimension_numbers<[1], [0], [0], [1], [0, 0, 1, 1], [], []>} : vector<8x32xf32>, vector<32x384xf32>, vector<8x384xf32> -> vector<8x384xf32>
    %3 = vector.extract_strided_slice %2 {offsets = [0, 0], sizes = [8, 128], strides = [1, 1]} : vector<8x384xf32> to vector<8x128xf32>
    %c0_3 = arith.constant 0 : index
    %c0_4 = arith.constant 0 : index
    %4 = vector.load %arg3[%c0_3, %c0_4] : memref<8x128xf32, #tpu.memory_space<vmem>>, vector<8x128xf32>
    tpu.vector_store %arg3[%c0_3, %c0_4], %3 {strides = array<i32>} : memref<8x128xf32, #tpu.memory_space<vmem>>, vector<8x128xf32>,
    %5 = vector.extract_strided_slice %2 {offsets = [0, 128], sizes = [8, 256], strides = [1, 1]} : vector<8x384xf32> to vector<8x256xf32>
    %c0_5 = arith.constant 0 : index
    %c0_6 = arith.constant 0 : index
    %6 = vector.load %arg4[%c0_5, %c0_6] : memref<8x256xf32, #tpu.memory_space<vmem>>, vector<8x256xf32>
    tpu.vector_store %arg4[%c0_5, %c0_6], %5 {strides = array<i32>} : memref<8x256xf32, #tpu.memory_space<vmem>>, vector<8x256xf32>,
    return
  }
  func.func @transform_0(%arg0: i32) -> (i32, i32) {
    %c0_i32 = arith.constant 0 : i32
    %c0_i32_0 = arith.constant 0 : i32
    return %arg0, %c0_i32 : i32, i32
  }
  func.func @transform_1(%arg0: i32) -> (i32, i32) {
    %c0_i32 = arith.constant 0 : i32
    %c0_i32_0 = arith.constant 0 : i32
    %c0_i32_1 = arith.constant 0 : i32
    return %c0_i32, %c0_i32_0 : i32, i32
  }
  func.func @transform_2(%arg0: i32) -> (i32, i32) {
    %c0_i32 = arith.constant 0 : i32
    %c0_i32_0 = arith.constant 0 : i32
    return %arg0, %c0_i32 : i32, i32
  }
  func.func @transform_3(%arg0: i32) -> (i32, i32) {
    %c0_i32 = arith.constant 0 : i32
    %c0_i32_0 = arith.constant 0 : i32
    return %arg0, %c0_i32 : i32, i32
  }
}

</mosaic_0001>

<llo_original>
// kernel: tpu_custom_call.1
$region0: #{tpu_custom_call.1}
  #allocation0 [shape = 'u32[]', space=smem, size = 0x4, offset = 0x4, fixed_abs, tag = 'smem constant byte address 0x4 - core index']
  #allocation1 [shape = 'u32[144,128]{1,0:T(1,128)}', space=vmem, size = 0x12000, scoped, tag = 'internal scratch']
  %s0 = inlined_call_operand.hbm [shape: f32[8,32], index: 0, kind: input, shape index: {}]
  %s1 = inlined_call_operand.hbm [shape: f32[32,384], index: 1, kind: input, shape index: {}]
  %s2 = inlined_call_operand.hbm [shape: f32[8,128], index: 2, kind: output, shape index: {0}]
  %s3 = inlined_call_operand.hbm [shape: f32[8,256], index: 3, kind: output, shape index: {1}]
  %4 = xla_tuple %s2, %s3
  %s5 = sld [smem:[#allocation0]]
  $region34: #{tpu_custom_call.1} parent=0
    _
  %s7 = ssub.s32 1, %s5
  %s8 = scalar_select 0, %s7, %s5
  $region1: #{tpu_custom_call.1} parent=0
    #allocation2 [shape = 'u8[4096]{0}', space=vmem, size = 0x1000, scoped, tag = 'input window, operand 0, single buffered']
    #allocation3 [shape = 's32[1]{0}', space=sflag, size = 0x4, scoped, tag = 'scoped memory for tpu_custom_call.1']
    #allocation4 [shape = 's32[1]{0}', space=sflag, size = 0x4, scoped, tag = 'scoped memory for tpu_custom_call.1']
    #allocation5 [shape = 'u8[49152]{0}', space=vmem, size = 0xc000, scoped, tag = 'input window, operand 1, single buffered']
    #allocation6 [shape = 's32[1]{0}', space=sflag, size = 0x4, scoped, tag = 'scoped memory for tpu_custom_call.1']
    #allocation7 [shape = 'u8[4096]{0}', space=vmem, size = 0x1000, scoped, tag = 'output window, operand 0, single buffered']
    #allocation8 [shape = 'u8[8192]{0}', space=vmem, size = 0x2000, scoped, tag = 'output window, operand 1, single buffered']
    #allocation9 [shape = 's32[1]{0}', space=sflag, size = 0x4, scoped, tag = 'scoped memory for tpu_custom_call.1']
    %9 = vsyncpa [#allocation3], 0
    %10 = vsyncpa [#allocation6], 0
    %11 = vsyncpa [#allocation4], 0
    %12 = vsyncpa [#allocation9], 0
    // Predicated region
    $region2: #{tpu_custom_call.1} parent=1 // pred_check
      _
    $region3: #{tpu_custom_call.1} parent=1 // pred_check_branch
      %14 = sbr.rel (0) target = $region5
    $region4: #{tpu_custom_call.1} parent=1 // pred_region
      %s16 = ssub.s32 128, 128
      %17 = vsyncadd [#allocation3], %s16
      %s19 = sshll.u32 [#allocation2], 4
      %s20 = int_to_ptr.vmem [resolvable:$true] %s19
      %22 = dma.hbm_to_vmem [thread:$0]  %s0, 128, %s20, [#allocation3]
    $region5: #{tpu_custom_call.1} parent=1 // pred_fallthru
      _
    // Predicated region
    $region6: #{tpu_custom_call.1} parent=1 // pred_check
      _
    $region7: #{tpu_custom_call.1} parent=1 // pred_check_branch
      %24 = sbr.rel (0) target = $region9
    $region8: #{tpu_custom_call.1} parent=1 // pred_region
      %s26 = ssub.s32 1536, 1536
      %27 = vsyncadd [#allocation6], %s26
      %s28 = sshll.u32 [#allocation5], 4
      %s29 = int_to_ptr.vmem [resolvable:$true] %s28
      %34 = dma.hbm_to_vmem [thread:$0]  %s1, 1536, %s29, [#allocation6], 384, 384, 24
    $region9: #{tpu_custom_call.1} parent=1 // pred_fallthru
      _
    // Predicated region
    $region10: #{tpu_custom_call.1} parent=1 // pred_check
      _
    $region11: #{tpu_custom_call.1} parent=1 // pred_check_branch
      %36 = sbr.rel (0) target = $region13
    $region12: #{tpu_custom_call.1} parent=1 // pred_region
      %37 = dma.done [#allocation3], 128
    $region13: #{tpu_custom_call.1} parent=1 // pred_fallthru
      _
    // Predicated region
    $region14: #{tpu_custom_call.1} parent=1 // pred_check
      _
    $region15: #{tpu_custom_call.1} parent=1 // pred_check_branch
      %39 = sbr.rel (0) target = $region17
    $region16: #{tpu_custom_call.1} parent=1 // pred_region
      %40 = dma.done [#allocation6], 1536
    $region17: #{tpu_custom_call.1} parent=1 // pred_fallthru
      _
    %v41 = vld [vmem:[#allocation2] sm:$0xff]
    %v42 = vld [vmem:[#allocation5] sm:$0xff]
    %v43 = vld [vmem:[#allocation5 + $0x8] sm:$0xff]
    %v44 = vld [vmem:[#allocation5 + $0x10] sm:$0xff]
    %v45 = vld [vmem:[#allocation5 + $0x18] sm:$0xff]
    %v46 = vld [vmem:[#allocation5 + $0x20] sm:$0xff]
    %v47 = vld [vmem:[#allocation5 + $0x28] sm:$0xff]
    %v48 = vld [vmem:[#allocation5 + $0x30] sm:$0xff]
    %v49 = vld [vmem:[#allocation5 + $0x38] sm:$0xff]
    %v50 = vld [vmem:[#allocation5 + $0x40] sm:$0xff]
    %v51 = vld [vmem:[#allocation5 + $0x48] sm:$0xff]
    %v52 = vld [vmem:[#allocation5 + $0x50] sm:$0xff]
    %v53 = vld [vmem:[#allocation5 + $0x58] sm:$0xff]
    %vm54 = vcmask 261120
    %v56 = vsel %vm54, %v41, 0
    %58 = vmatprep.subr.mxu0 %v43
    %59 = vmatpush1.msra.mxu0 %v42
    %60 = vmatprep.subr.mxu0 %v46
    %61 = vmatpush1.msra.mxu0 %v45
    %62 = vmatprep.subr.mxu0 %v49
    %63 = vmatpush1.msra.mxu0 %v48
    %64 = vmatprep.subr.mxu0 %v52
    %65 = vmatpush1.msra.mxu0 %v51
    %66 = vmatprep.subr.mxu0 0.0
    %67 = vmatpush1.msra.mxu0 0.0
    %68 = vmatprep.subr.mxu0 0.0
    %69 = vmatpush1.msra.mxu0 0.0
    %70 = vmatprep.subr.mxu0 0.0
    %71 = vmatpush1.msra.mxu0 0.0
    %72 = vmatprep.subr.mxu0 0.0
    %73 = vmatpush1.msra.mxu0 0.0
    %74 = vmatprep.subr.mxu0 0.0
    %75 = vmatpush1.msra.mxu0 0.0
    %76 = vmatprep.subr.mxu0 0.0
    %77 = vmatpush1.msra.mxu0 0.0
    %78 = vmatprep.subr.mxu0 0.0
    %79 = vmatpush1.msra.mxu0 0.0
    %80 = vmatprep.subr.mxu0 0.0
    %81 = vmatpush1.msra.mxu0 0.0
    %82 = vmatprep.subr.mxu0 0.0
    %83 = vmatpush1.msra.mxu0 0.0
    %84 = vmatprep.subr.mxu0 0.0
    %85 = vmatpush1.msra.mxu0 0.0
    %86 = vmatprep.subr.mxu0 0.0
    %87 = vmatpush1.msra.mxu0 0.0
    %88 = vmatprep.subr.mxu0 0.0
    %89 = vmatpush1.msra.mxu0 0.0
    %90 = vmatprep.subr.mxu0 0.0
    %91 = vmatpush1.msra.mxu0 0.0
    %92 = vmatprep.subr.mxu0 0.0
    %93 = vmatpush1.msra.mxu0 0.0
    %94 = vmatprep.subr.mxu0 0.0
    %95 = vmatpush1.msra.mxu0 0.0
    %96 = vmatprep.subr.mxu0 0.0
    %97 = vmatpush1.msra.mxu0 0.0
    %98 = vmatprep.subr.mxu0 0.0
    %99 = vmatpush1.msra.mxu0 0.0
    %100 = vmatprep.subr.mxu0 0.0
    %101 = vmatpush1.msra.mxu0 0.0
    %102 = vmatprep.subr.mxu0 0.0
    %103 = vmatpush1.msra.mxu0 0.0
    %104 = vmatprep.subr.mxu0 0.0
    %105 = vmatpush1.msra.mxu0 0.0
    %106 = vmatprep.subr.mxu0 0.0
    %107 = vmatpush1.msra.mxu0 0.0
    %108 = vmatprep.subr.mxu0 0.0
    %109 = vmatpush1.msra.mxu0 0.0
    %110 = vmatprep.subr.mxu0 0.0
    %111 = vmatpush1.msra.mxu0 0.0
    %112 = vmatprep.subr.mxu0 0.0
    %113 = vmatpush1.msra.mxu0 0.0
    %114 = vmatprep.subr.mxu0 0.0
    %115 = vmatpush1.msra.mxu0 0.0
    %116 = vmatprep.subr.mxu0 0.0
    %117 = vmatpush1.msra.mxu0 0.0
    %118 = vmatprep.subr.mxu0 0.0
    %119 = vmatpush1.msra.mxu0 0.0
    %120 = vmatprep.subr.mxu0 0.0
    %121 = vmatpush1.msra.mxu0 0.0
    %122 = vmatprep.mubr.f32.mxu0 0.0
    %123 = vmatmul.mubr.f32.gmra.mrb[0].mxu0 %v56
    %v124 = vpop.f32.mrb[0].mxu0
    %v125 = vadd.f32 0.0, %v124
    %v126 = vpop.f32.mrb[0].mxu0
    %v127 = vadd.f32 0.0, %v126
    %128 = vdwg.mxu0
    %129 = vmatprep.subr.mxu0 0.0
    %130 = vmatpush1.msra.mxu0 %v44
    %131 = vmatprep.subr.mxu0 0.0
    %132 = vmatpush1.msra.mxu0 %v47
    %133 = vmatprep.subr.mxu0 0.0
    %134 = vmatpush1.msra.mxu0 %v50
    %135 = vmatprep.subr.mxu0 0.0
    %136 = vmatpush1.msra.mxu0 %v53
    %137 = vmatprep.subr.mxu0 0.0
    %138 = vmatpush1.msra.mxu0 0.0
    %139 = vmatprep.subr.mxu0 0.0
    %140 = vmatpush1.msra.mxu0 0.0
    %141 = vmatprep.subr.mxu0 0.0
    %142 = vmatpush1.msra.mxu0 0.0
    %143 = vmatprep.subr.mxu0 0.0
    %144 = vmatpush1.msra.mxu0 0.0
    %145 = vmatprep.subr.mxu0 0.0
    %146 = vmatpush1.msra.mxu0 0.0
    %147 = vmatprep.subr.mxu0 0.0
    %148 = vmatpush1.msra.mxu0 0.0
    %149 = vmatprep.subr.mxu0 0.0
    %150 = vmatpush1.msra.mxu0 0.0
    %151 = vmatprep.subr.mxu0 0.0
    %152 = vmatpush1.msra.mxu0 0.0
    %153 = vmatprep.subr.mxu0 0.0
    %154 = vmatpush1.msra.mxu0 0.0
    %155 = vmatprep.subr.mxu0 0.0
    %156 = vmatpush1.msra.mxu0 0.0
    %157 = vmatprep.subr.mxu0 0.0
    %158 = vmatpush1.msra.mxu0 0.0
    %159 = vmatprep.subr.mxu0 0.0
    %160 = vmatpush1.msra.mxu0 0.0
    %161 = vmatprep.subr.mxu0 0.0
    %162 = vmatpush1.msra.mxu0 0.0
    %163 = vmatprep.subr.mxu0 0.0
    %164 = vmatpush1.msra.mxu0 0.0
    %165 = vmatprep.subr.mxu0 0.0
    %166 = vmatpush1.msra.mxu0 0.0
    %167 = vmatprep.subr.mxu0 0.0
    %168 = vmatpush1.msra.mxu0 0.0
    %169 = vmatprep.subr.mxu0 0.0
    %170 = vmatpush1.msra.mxu0 0.0
    %171 = vmatprep.subr.mxu0 0.0
    %172 = vmatpush1.msra.mxu0 0.0
    %173 = vmatprep.subr.mxu0 0.0
    %174 = vmatpush1.msra.mxu0 0.0
    %175 = vmatprep.subr.mxu0 0.0
    %176 = vmatpush1.msra.mxu0 0.0
    %177 = vmatprep.subr.mxu0 0.0
    %178 = vmatpush1.msra.mxu0 0.0
    %179 = vmatprep.subr.mxu0 0.0
    %180 = vmatpush1.msra.mxu0 0.0
    %181 = vmatprep.subr.mxu0 0.0
    %182 = vmatpush1.msra.mxu0 0.0
    %183 = vmatprep.subr.mxu0 0.0
    %184 = vmatpush1.msra.mxu0 0.0
    %185 = vmatprep.subr.mxu0 0.0
    %186 = vmatpush1.msra.mxu0 0.0
    %187 = vmatprep.subr.mxu0 0.0
    %188 = vmatpush1.msra.mxu0 0.0
    %189 = vmatprep.subr.mxu0 0.0
    %190 = vmatpush1.msra.mxu0 0.0
    %191 = vmatprep.subr.mxu0 0.0
    %192 = vmatpush1.msra.mxu0 0.0
    %193 = vmatprep.mubr.f32.mxu0 0.0
    %194 = vmatmul.mubr.f32.gmra.mrb[0].mxu0 %v56
    %v195 = vpop.f32.mrb[0].mxu0
    %v196 = vadd.f32 0.0, %v195
    %v197 = vpop.f32.mrb[0].mxu0
    %198 = vdwg.mxu0
    %199 = vst [vmem:[#allocation7] sm:$0xff] %v125
    %200 = vst [vmem:[#allocation8] sm:$0xff] %v127
    %201 = vst [vmem:[#allocation8 + $0x8] sm:$0xff] %v196
    // Predicated region
    $region18: #{tpu_custom_call.1} parent=1 // pred_check
      _
    $region19: #{tpu_custom_call.1} parent=1 // pred_check_branch
      %203 = sbr.rel (0) target = $region21
    $region20: #{tpu_custom_call.1} parent=1 // pred_region
      %s205 = ssub.s32 128, 128
      %206 = vsyncadd [#allocation4], %s205
      %s208 = sshll.u32 [#allocation7], 4
      %s209 = int_to_ptr.vmem [resolvable:$true] %s208
      %211 = dma.vmem_to_hbm [thread:$0]  %s209, 128, %s2, [#allocation4]
    $region21: #{tpu_custom_call.1} parent=1 // pred_fallthru
      _
    // Predicated region
    $region22: #{tpu_custom_call.1} parent=1 // pred_check
      _
    $region23: #{tpu_custom_call.1} parent=1 // pred_check_branch
      %213 = sbr.rel (0) target = $region25
    $region24: #{tpu_custom_call.1} parent=1 // pred_region
      %s215 = ssub.s32 256, 256
      %216 = vsyncadd [#allocation9], %s215
      %s218 = sshll.u32 [#allocation8], 4
      %s219 = int_to_ptr.vmem [resolvable:$true] %s218
      %221 = dma.vmem_to_hbm [thread:$0]  %s219, 256, %s3, [#allocation9]
    $region25: #{tpu_custom_call.1} parent=1 // pred_fallthru
      _
    // Predicated region
    $region26: #{tpu_custom_call.1} parent=1 // pred_check
      _
    $region27: #{tpu_custom_call.1} parent=1 // pred_check_branch
      %223 = sbr.rel (0) target = $region29
    $region28: #{tpu_custom_call.1} parent=1 // pred_region
      %224 = dma.done [#allocation4], 128
    $region29: #{tpu_custom_call.1} parent=1 // pred_fallthru
      _
    // Predicated region
    $region30: #{tpu_custom_call.1} parent=1 // pred_check
      _
    $region31: #{tpu_custom_call.1} parent=1 // pred_check_branch
      %226 = sbr.rel (0) target = $region33
    $region32: #{tpu_custom_call.1} parent=1 // pred_region
      %227 = dma.done [#allocation9], 256
    $region33: #{tpu_custom_call.1} parent=1 // pred_fallthru
      _
    %228 = vsyncpa [#allocation3], 1
    %229 = vsyncpa [#allocation6], 1
    %230 = vsyncpa [#allocation4], 1
    %231 = vsyncpa [#allocation9], 1

</llo_original>
